<compile_context>
chip_gen: v5e
topology: v5e:2x2
jax: 0.10.0
libtpu: 0.0.40
codegen_flags: <defaults>
</compile_context>

<pallas_src>
import numpy as np
import jax
import jax.numpy as jnp
from jax import lax
from jax.experimental import pallas as pl
from jax.experimental.pallas import tpu as pltpu


def _round_up(v, m):
    return ((v + m - 1) // m) * m


def _vmem_limit_bytes():
    # Review: default scoped VMEM (16-32 MiB) is too small -> ~48 MiB on v7x,
    # ~100 MiB on v5e/v6e, with headroom left for the runtime.
    try:
        cap = int(pltpu.get_tpu_info().vmem_capacity_bytes)
    except Exception:
        cap = 64 * 1024 * 1024
    return int(max(32 * 1024 * 1024,
                   min(cap - 16 * 1024 * 1024, 100 * 1024 * 1024)))


# ---------------------------------------------------------------------------
# Fused Pallas kernel
# ---------------------------------------------------------------------------
def _graph_conv_fused_kernel(off_ref,                 # scalar prefetch (SMEM)
                             seg_ref, idx_ref, ef_ref, xT_ref, wfT_ref,
                             bfT_ref, invd_ref,       # inputs
                             out_ref,                 # output (resident acc)
                             gnode_iota, wnode_iota): # VMEM scratch (iotas)
    c = pl.program_id(0)                 # partial / TensorCore split
    t = pl.program_id(1)                 # edge-tile loop (reduction axis)
    tiles_per_core = pl.num_programs(1)

    @pl.when(t == 0)
    def _init():
        out_ref[...] = jnp.zeros_like(out_ref)
        # hoisted iota planes: built once per core, reused every tile
        gnode_iota[...] = lax.broadcasted_iota(jnp.int32, gnode_iota.shape, 0)
        wnode_iota[...] = lax.broadcasted_iota(jnp.int32, wnode_iota.shape, 0)

    cdt = xT_ref.dtype
    cin = xT_ref.shape[0]
    cout = out_ref.shape[1]
    w_win = wnode_iota.shape[0]

    # (1) edge-filter network, transposed/lane-dense: w2dT (K, TE), f32 result.
    w2dT = (jnp.dot(wfT_ref[...], ef_ref[...],
                    preferred_element_type=jnp.float32)
            + bfT_ref[...])                                   # (K, TE)

    # (2) fused x[idxn] gather: one-hot (N_pad, TE) built with a sublane splat
    #     of the lane-dense idx row, contracted on the MXU -> selT (Cin, TE).
    gmask = (gnode_iota[...] == idx_ref[...]).astype(cdt)     # (N_pad, TE)
    selT = jnp.dot(xT_ref[...], gmask,
                   preferred_element_type=jnp.float32)        # (Cin, TE)

    # (3) per-edge (1 x Cin) @ (Cin x Cout) product, kept edges-in-lanes:
    #     sublane-broadcast multiplies over Cout-row slices of w2dT.
    prodT = selT[0:1, :] * w2dT[0:cout, :]
    for i in range(1, cin):
        prodT = prodT + selT[i:i + 1, :] * w2dT[i * cout:(i + 1) * cout, :]
    prodT = prodT.astype(cdt)                                 # (Cout, TE)

    # (4) CSR windowed segment-sum: this tile only touches nodes
    #     [off, off + W).  off comes from SMEM scalar prefetch, 8-aligned.
    gtile = c * tiles_per_core + t
    off = pl.multiple_of(off_ref[gtile], 8)
    seg_rel = seg_ref[...] - off                              # (1, TE) i32
    smask = (wnode_iota[...] == seg_rel).astype(cdt)          # (W, TE)
    partial = lax.dot_general(                                # (W, Cout)
        smask, prodT,
        dimension_numbers=(((1,), (1,)), ((), ())),
        preferred_element_type=jnp.float32)
    out_ref[pl.ds(off, w_win), :] = out_ref[pl.ds(off, w_win), :] + partial

    # (5) epilogue: mean = sum * (1/deg); deg==0 (and padded) rows stay 0.
    @pl.when(t == tiles_per_core - 1)
    def _finalize():
        out_ref[...] = out_ref[...] * invd_ref[...]


# ---------------------------------------------------------------------------
# Wrapper
# ---------------------------------------------------------------------------
def graph_conv_module_forward(x, idxn, degs, edgefeats, Wf, bf, in_ch, out_ch,
                              idxe=None, edge_tile=512, num_partials=2,
                              compute_dtype=jnp.bfloat16):
    """Equivalent of GraphConvModulePureAutograd.forward (fnet = Linear(Wf, bf))."""
    degs_np = np.asarray(degs, dtype=np.int64)
    N = int(degs_np.shape[0])
    E = int(degs_np.sum())
    Cin, Cout = int(in_ch), int(out_ch)
    K = Cin * Cout

    x = jnp.asarray(x, jnp.float32)
    Wf = jnp.asarray(Wf, jnp.float32)
    bf = jnp.asarray(bf, jnp.float32).reshape(K)
    edgefeats = jnp.asarray(edgefeats, jnp.float32)
    idxn = jnp.asarray(idxn, jnp.int32)
    assert Wf.shape[1] == K and x.shape[1] == Cin

    if idxe is not None:
        # fnet is row-wise, so fnet(ef)[idxe] == fnet(ef[idxe]); gather the
        # small edge-feature rows instead of the (E, Cin*Cout) weights.
        edgefeats = edgefeats[jnp.asarray(idxe, jnp.int32)]
    F = int(edgefeats.shape[1])

    # ---- O(N)+O(E) host prep ------------------------------------------------
    seg_np = np.repeat(np.arange(N, dtype=np.int32), degs_np)            # (E,)
    inv_deg_np = np.where(degs_np > 0, 1.0 / np.maximum(degs_np, 1), 0.0)
    inv_deg_np = inv_deg_np.astype(np.float32)

    N_pad = _round_up(max(N, 1), 8)
    vmem_limit = _vmem_limit_bytes()

    # ---- edge tiling: TE multiple of 128, capped so the O(N_pad*TE) gather
    #      mask / iota temporaries stay well inside the VMEM budget -----------
    TE = max(128, (int(edge_tile) // 128) * 128)
    te_cap = max(128, ((vmem_limit // 3) // max(1, 8 * N_pad)) // 128 * 128)
    TE = min(TE, te_cap, _round_up(max(E, 1), 128))
    num_partials = max(1, int(num_partials))
    num_tiles = _round_up(-(-max(E, 1) // TE), num_partials)
    tiles_per_core = num_tiles // num_partials
    E_pad = num_tiles * TE

    # ---- per-tile CSR node windows (seg is monotone non-decreasing) ---------
    offs = np.zeros((num_tiles,), dtype=np.int32)
    W = 8
    for t in range(num_tiles):
        lo, hi = t * TE, min((t + 1) * TE, E)
        if lo < hi:
            first, last = int(seg_np[lo]), int(seg_np[hi - 1])
            offs[t] = (first // 8) * 8
            W = max(W, last - offs[t] + 1)
    W = min(_round_up(W, 8), N_pad)
    offs = np.minimum(offs, N_pad - W).astype(np.int32)

    # ---- lane-dense, padded operands ----------------------------------------
    cdt = compute_dtype
    seg_row = np.full((1, E_pad), -1, dtype=np.int32)   # -1 = matches no node
    seg_row[0, :E] = seg_np
    seg_row = jnp.asarray(seg_row)
    idx_row = jnp.pad(idxn, (0, E_pad - E)).reshape(1, E_pad)
    efT = jnp.pad(edgefeats, ((0, E_pad - E), (0, 0))).T.astype(cdt)  # (F, E_pad)
    xT = jnp.pad(x, ((0, N_pad - N), (0, 0))).T.astype(cdt)          # (Cin, N_pad)
    WfT = Wf.T.astype(cdt)                                           # (K, F)
    bfT = bf.reshape(K, 1)                                           # (K, 1) f32
    inv_deg = jnp.asarray(np.pad(inv_deg_np, (0, N_pad - N))).reshape(N_pad, 1)

    def edge_map(c, t, off_ref):
        return (0, c * tiles_per_core + t)

    def res_map(c, t, off_ref):
        return (0, 0)

    grid_spec = pltpu.PrefetchScalarGridSpec(
        num_scalar_prefetch=1,                       # per-tile node-window offsets
        grid=(num_partials, tiles_per_core),
        in_specs=[
            pl.BlockSpec((1, TE), edge_map),         # segment id per edge
            pl.BlockSpec((1, TE), edge_map),         # source node per edge
            pl.BlockSpec((F, TE), edge_map),         # edge features (transposed)
            pl.BlockSpec((Cin, N_pad), res_map),     # node features (resident)
            pl.BlockSpec((K, F), res_map),           # fnet weight^T (resident)
            pl.BlockSpec((K, 1), res_map),           # fnet bias (resident)
            pl.BlockSpec((N_pad, 1), res_map),       # 1/deg (resident)
        ],
        out_specs=pl.BlockSpec((N_pad, Cout), lambda c, t, off_ref: (c, 0)),
        scratch_shapes=[pltpu.VMEM((N_pad, TE), jnp.int32),   # gather iota
                        pltpu.VMEM((W, TE), jnp.int32)],      # window iota
    )

    out = pl.pallas_call(
        _graph_conv_fused_kernel,
        grid_spec=grid_spec,
        out_shape=jax.ShapeDtypeStruct((num_partials * N_pad, Cout), jnp.float32),
        compiler_params=pltpu.CompilerParams(
            dimension_semantics=("parallel", "arbitrary"),
            vmem_limit_bytes=vmem_limit),
    )(jnp.asarray(offs), seg_row, idx_row, efT, xT, WfT, bfT, inv_deg)

    # one cheap XLA add combines the per-core partial sums (each already * 1/deg)
    out = out.reshape(num_partials, N_pad, Cout).sum(axis=0)
    return out[:N]


# ---------------------------------------------------------------------------
# Demo / self-check
# ---------------------------------------------------------------------------
if __name__ == "__main__":
    in_ch, out_ch = 4, 8
    edge_feat_dim = 6
    degs = [3, 0, 2, 4, 1, 2]          # per-node edge counts (one zero-degree node)
    num_nodes = len(degs)
    num_edges = int(sum(degs))

    key = jax.random.PRNGKey(0)
    k_x, k_ef, k_wf, k_bf, k_idx = jax.random.split(key, 5)

    x = jax.random.normal(k_x, (num_nodes, in_ch), dtype=jnp.float32)
    edgefeats = jax.random.normal(k_ef, (num_edges, edge_feat_dim), dtype=jnp.float32)
    Wf = jax.random.normal(k_wf, (edge_feat_dim, in_ch * out_ch), dtype=jnp.float32) * 0.1
    bf = jax.random.normal(k_bf, (1, in_ch * out_ch), dtype=jnp.float32) * 0.1
    idxn = jax.random.randint(k_idx, (num_edges,), 0, num_nodes, dtype=jnp.int32)

    # pure-JAX reference (mirrors the PyTorch forward exactly)
    w_ref = (edgefeats @ Wf + bf).reshape(-1, in_ch, out_ch)
    prod_ref = jnp.einsum("ei,eio->eo", x[idxn], w_ref)
    ref_rows = []
    k = 0
    for d in degs:
        if d > 0:
            ref_rows.append(jnp.mean(prod_ref[k:k + d], axis=0))
        else:
            ref_rows.append(jnp.zeros((out_ch,), jnp.float32))
        k += d
    ref = np.asarray(jnp.stack(ref_rows, axis=0))

    # exact f32 path
    out_f32 = graph_conv_module_forward(x, idxn, degs, edgefeats, Wf, bf,
                                        in_ch, out_ch, compute_dtype=jnp.float32)
    out_f32 = jax.block_until_ready(out_f32)
    np.testing.assert_allclose(np.asarray(out_f32), ref, rtol=1e-4, atol=1e-4)

    # bf16 MXU fast path (masks are exact 0/1; data rounded to bf16, f32 accumulate)
    out_bf16 = graph_conv_module_forward(x, idxn, degs, edgefeats, Wf, bf,
                                         in_ch, out_ch, compute_dtype=jnp.bfloat16)
    out_bf16 = jax.block_until_ready(out_bf16)
    np.testing.assert_allclose(np.asarray(out_bf16), ref, rtol=5e-2, atol=5e-2)

    assert out_f32.shape == (num_nodes, out_ch) and out_f32.dtype == jnp.float32
    print("KERNEL_OK")
</pallas_src>

<mosaic_0001>
module attributes {stable_mosaic.version = 11 : i64} {
  func.func @_graph_conv_fused_kernel(%arg0: i32, %arg1: i32, %arg2: memref<2xi32, #tpu.memory_space<smem>>, %arg3: memref<1x128xi32, #tpu.memory_space<vmem>>, %arg4: memref<1x128xi32, #tpu.memory_space<vmem>>, %arg5: memref<6x128xf32, #tpu.memory_space<vmem>>, %arg6: memref<4x8xf32, #tpu.memory_space<vmem>>, %arg7: memref<32x6xf32, #tpu.memory_space<vmem>>, %arg8: memref<32x1xf32, #tpu.memory_space<vmem>>, %arg9: memref<8x1xf32, #tpu.memory_space<vmem>>, %arg10: memref<8x8xf32, #tpu.memory_space<vmem>>, %arg11: memref<8x128xi32, #tpu.memory_space<vmem>>, %arg12: memref<8x128xi32, #tpu.memory_space<vmem>>) attributes {dimension_semantics = [#tpu.dimension_semantics<parallel>, #tpu.dimension_semantics<arbitrary>], iteration_bounds = array<i64: 2, 1>, scalar_prefetch = 1 : i64, scratch_operands = 2 : i64, tpu.core_type = #tpu.core_type<tc>, window_params = [{transform_indices = @transform_0, window_bounds = array<i64: 1, 128>}, {transform_indices = @transform_1, window_bounds = array<i64: 1, 128>}, {transform_indices = @transform_2, window_bounds = array<i64: 6, 128>}, {pipeline_mode = #tpu.pipeline_mode<synchronous>, transform_indices = @transform_3, window_bounds = array<i64: 4, 8>}, {pipeline_mode = #tpu.pipeline_mode<synchronous>, transform_indices = @transform_4, window_bounds = array<i64: 32, 6>}, {pipeline_mode = #tpu.pipeline_mode<synchronous>, transform_indices = @transform_5, window_bounds = array<i64: 32, 1>}, {pipeline_mode = #tpu.pipeline_mode<synchronous>, transform_indices = @transform_6, window_bounds = array<i64: 8, 1>}, {transform_indices = @transform_7, window_bounds = array<i64: 8, 8>}]} {
    %c0_i32 = arith.constant 0 : i32
    %0 = arith.cmpi eq, %arg1, %c0_i32 : i32
    %1 = arith.extui %0 : i1 to i32
    %c0_i32_0 = arith.constant 0 : i32
    %2 = arith.cmpi ne, %1, %c0_i32_0 : i32
    scf.if %2 {
      %cst_22 = arith.constant 0.000000e+00 : f32
      %58 = vector.broadcast %cst_22 : f32 to vector<8x8xf32>
      %c0_23 = arith.constant 0 : index
      %c0_24 = arith.constant 0 : index
      %59 = vector.load %arg10[%c0_23, %c0_24] : memref<8x8xf32, #tpu.memory_space<vmem>>, vector<8x8xf32>
      tpu.vector_store %arg10[%c0_23, %c0_24], %58 {strides = array<i32>} : memref<8x8xf32, #tpu.memory_space<vmem>>, vector<8x8xf32>,
      %60 = tpu.iota {dimensions = array<i32: 0>} : vector<8x128xi32>
      %c0_25 = arith.constant 0 : index
      %c0_26 = arith.constant 0 : index
      %61 = vector.load %arg11[%c0_25, %c0_26] : memref<8x128xi32, #tpu.memory_space<vmem>>, vector<8x128xi32>
      tpu.vector_store %arg11[%c0_25, %c0_26], %60 {strides = array<i32>} : memref<8x128xi32, #tpu.memory_space<vmem>>, vector<8x128xi32>,
      %62 = tpu.iota {dimensions = array<i32: 0>} : vector<8x128xi32>
      %c0_27 = arith.constant 0 : index
      %c0_28 = arith.constant 0 : index
      %63 = vector.load %arg12[%c0_27, %c0_28] : memref<8x128xi32, #tpu.memory_space<vmem>>, vector<8x128xi32>
      tpu.vector_store %arg12[%c0_27, %c0_28], %62 {strides = array<i32>} : memref<8x128xi32, #tpu.memory_space<vmem>>, vector<8x128xi32>,
    } else {
    }
    %c0 = arith.constant 0 : index
    %c0_1 = arith.constant 0 : index
    %3 = vector.load %arg7[%c0, %c0_1] : memref<32x6xf32, #tpu.memory_space<vmem>>, vector<32x6xf32>
    %c0_2 = arith.constant 0 : index
    %c0_3 = arith.constant 0 : index
    %4 = vector.load %arg5[%c0_2, %c0_3] : memref<6x128xf32, #tpu.memory_space<vmem>>, vector<6x128xf32>
    %cst = arith.constant dense<0.000000e+00> : vector<32x128xf32>
    %5 = tpu.matmul %3, %4, %cst {dimension_numbers = #tpu.dot_dimension_numbers<[1], [0], [0], [1], [0, 0, 1, 1], [], []>} : vector<32x6xf32>, vector<6x128xf32>, vector<32x128xf32> -> vector<32x128xf32>
    %c0_4 = arith.constant 0 : index
    %c0_5 = arith.constant 0 : index
    %6 = vector.load %arg8[%c0_4, %c0_5] : memref<32x1xf32, #tpu.memory_space<vmem>>, vector<32x1xf32>
    %7 = vector.broadcast %6 : vector<32x1xf32> to vector<32x128xf32>
    %8 = arith.addf %5, %7 : vector<32x128xf32>
    %c0_6 = arith.constant 0 : index
    %c0_7 = arith.constant 0 : index
    %9 = vector.load %arg11[%c0_6, %c0_7] : memref<8x128xi32, #tpu.memory_space<vmem>>, vector<8x128xi32>
    %c0_8 = arith.constant 0 : index
    %c0_9 = arith.constant 0 : index
    %10 = vector.load %arg4[%c0_8, %c0_9] : memref<1x128xi32, #tpu.memory_space<vmem>>, vector<1x128xi32>
    %11 = vector.broadcast %10 : vector<1x128xi32> to vector<8x128xi32>
    %12 = arith.cmpi eq, %9, %11 : vector<8x128xi32>
    %13 = arith.extui %12 : vector<8x128xi1> to vector<8x128xi32>
    %14 = arith.sitofp %13 : vector<8x128xi32> to vector<8x128xf32>
    %c0_10 = arith.constant 0 : index
    %c0_11 = arith.constant 0 : index
    %15 = vector.load %arg6[%c0_10, %c0_11] : memref<4x8xf32, #tpu.memory_space<vmem>>, vector<4x8xf32>
    %cst_12 = arith.constant dense<0.000000e+00> : vector<4x128xf32>
    %16 = tpu.matmul %15, %14, %cst_12 {dimension_numbers = #tpu.dot_dimension_numbers<[1], [0], [0], [1], [0, 0, 1, 1], [], []>} : vector<4x8xf32>, vector<8x128xf32>, vector<4x128xf32> -> vector<4x128xf32>
    %17 = vector.extract_strided_slice %16 {offsets = [0, 0], sizes = [1, 128], strides = [1, 1]} : vector<4x128xf32> to vector<1x128xf32>
    %18 = vector.extract_strided_slice %8 {offsets = [0, 0], sizes = [8, 128], strides = [1, 1]} : vector<32x128xf32> to vector<8x128xf32>
    %19 = vector.broadcast %17 : vector<1x128xf32> to vector<8x128xf32>
    %20 = arith.mulf %19, %18 : vector<8x128xf32>
    %21 = vector.extract_strided_slice %16 {offsets = [1, 0], sizes = [1, 128], strides = [1, 1]} : vector<4x128xf32> to vector<1x128xf32>
    %22 = vector.extract_strided_slice %8 {offsets = [8, 0], sizes = [8, 128], strides = [1, 1]} : vector<32x128xf32> to vector<8x128xf32>
    %23 = vector.broadcast %21 : vector<1x128xf32> to vector<8x128xf32>
    %24 = arith.mulf %23, %22 : vector<8x128xf32>
    %25 = arith.addf %20, %24 : vector<8x128xf32>
    %26 = vector.extract_strided_slice %16 {offsets = [2, 0], sizes = [1, 128], strides = [1, 1]} : vector<4x128xf32> to vector<1x128xf32>
    %27 = vector.extract_strided_slice %8 {offsets = [16, 0], sizes = [8, 128], strides = [1, 1]} : vector<32x128xf32> to vector<8x128xf32>
    %28 = vector.broadcast %26 : vector<1x128xf32> to vector<8x128xf32>
    %29 = arith.mulf %28, %27 : vector<8x128xf32>
    %30 = arith.addf %25, %29 : vector<8x128xf32>
    %31 = vector.extract_strided_slice %16 {offsets = [3, 0], sizes = [1, 128], strides = [1, 1]} : vector<4x128xf32> to vector<1x128xf32>
    %32 = vector.extract_strided_slice %8 {offsets = [24, 0], sizes = [8, 128], strides = [1, 1]} : vector<32x128xf32> to vector<8x128xf32>
    %33 = vector.broadcast %31 : vector<1x128xf32> to vector<8x128xf32>
    %34 = arith.mulf %33, %32 : vector<8x128xf32>
    %35 = arith.addf %30, %34 : vector<8x128xf32>
    %c1_i32 = arith.constant 1 : i32
    %36 = arith.muli %arg0, %c1_i32 : i32
    %37 = arith.addi %36, %arg1 : i32
    %38 = arith.index_cast %37 : i32 to index
    %39 = memref.load %arg2[%38] : memref<2xi32, #tpu.memory_space<smem>>
    %40 = tpu.assume_multiple %39, 8 : i32
    %c0_13 = arith.constant 0 : index
    %c0_14 = arith.constant 0 : index
    %41 = vector.load %arg3[%c0_13, %c0_14] : memref<1x128xi32, #tpu.memory_space<vmem>>, vector<1x128xi32>
    %42 = vector.broadcast %40 : i32 to vector<1x128xi32>
    %43 = arith.subi %41, %42 : vector<1x128xi32>
    %c0_15 = arith.constant 0 : index
    %c0_16 = arith.constant 0 : index
    %44 = vector.load %arg12[%c0_15, %c0_16] : memref<8x128xi32, #tpu.memory_space<vmem>>, vector<8x128xi32>
    %45 = vector.broadcast %43 : vector<1x128xi32> to vector<8x128xi32>
    %46 = arith.cmpi eq, %44, %45 : vector<8x128xi32>
    %47 = arith.extui %46 : vector<8x128xi1> to vector<8x128xi32>
    %48 = arith.sitofp %47 : vector<8x128xi32> to vector<8x128xf32>
    %cst_17 = arith.constant dense<0.000000e+00> : vector<8x8xf32>
    %49 = tpu.matmul %48, %35, %cst_17 {dimension_numbers = #tpu.dot_dimension_numbers<[1], [1], [0], [0], [0, 0, 1, 0], [], []>} : vector<8x128xf32>, vector<8x128xf32>, vector<8x8xf32> -> vector<8x8xf32>
    %50 = arith.index_cast %40 : i32 to index
    %c0_18 = arith.constant 0 : index
    %51 = vector.load %arg10[%50, %c0_18] : memref<8x8xf32, #tpu.memory_space<vmem>>, vector<8x8xf32>
    %52 = arith.addf %51, %49 : vector<8x8xf32>
    %53 = arith.index_cast %40 : i32 to index
    %c0_19 = arith.constant 0 : index
    %54 = vector.load %arg10[%53, %c0_19] : memref<8x8xf32, #tpu.memory_space<vmem>>, vector<8x8xf32>
    tpu.vector_store %arg10[%53, %c0_19], %52 {strides = array<i32>} : memref<8x8xf32, #tpu.memory_space<vmem>>, vector<8x8xf32>,
    %c0_i32_20 = arith.constant 0 : i32
    %55 = arith.cmpi eq, %arg1, %c0_i32_20 : i32
    %56 = arith.extui %55 : i1 to i32
    %c0_i32_21 = arith.constant 0 : i32
    %57 = arith.cmpi ne, %56, %c0_i32_21 : i32
    scf.if %57 {
      %c0_22 = arith.constant 0 : index
      %c0_23 = arith.constant 0 : index
      %58 = vector.load %arg10[%c0_22, %c0_23] : memref<8x8xf32, #tpu.memory_space<vmem>>, vector<8x8xf32>
      %c0_24 = arith.constant 0 : index
      %c0_25 = arith.constant 0 : index
      %59 = vector.load %arg9[%c0_24, %c0_25] : memref<8x1xf32, #tpu.memory_space<vmem>>, vector<8x1xf32>
      %60 = vector.broadcast %59 : vector<8x1xf32> to vector<8x8xf32>
      %61 = arith.mulf %58, %60 : vector<8x8xf32>
      %c0_26 = arith.constant 0 : index
      %c0_27 = arith.constant 0 : index
      %62 = vector.load %arg10[%c0_26, %c0_27] : memref<8x8xf32, #tpu.memory_space<vmem>>, vector<8x8xf32>
      tpu.vector_store %arg10[%c0_26, %c0_27], %61 {strides = array<i32>} : memref<8x8xf32, #tpu.memory_space<vmem>>, vector<8x8xf32>,
    } else {
    }
    return
  }
  func.func @transform_0(%arg0: i32, %arg1: i32, %arg2: memref<2xi32, #tpu.memory_space<smem>>) -> (i32, i32) {
    %c1_i32 = arith.constant 1 : i32
    %0 = arith.muli %arg0, %c1_i32 : i32
    %1 = arith.addi %0, %arg1 : i32
    %c0_i32 = arith.constant 0 : i32
    %c0_i32_0 = arith.constant 0 : i32
    return %c0_i32, %1 : i32, i32
  }
  func.func @transform_1(%arg0: i32, %arg1: i32, %arg2: memref<2xi32, #tpu.memory_space<smem>>) -> (i32, i32) {
    %c1_i32 = arith.constant 1 : i32
    %0 = arith.muli %arg0, %c1_i32 : i32
    %1 = arith.addi %0, %arg1 : i32
    %c0_i32 = arith.constant 0 : i32
    %c0_i32_0 = arith.constant 0 : i32
    return %c0_i32, %1 : i32, i32
  }
  func.func @transform_2(%arg0: i32, %arg1: i32, %arg2: memref<2xi32, #tpu.memory_space<smem>>) -> (i32, i32) {
    %c1_i32 = arith.constant 1 : i32
    %0 = arith.muli %arg0, %c1_i32 : i32
    %1 = arith.addi %0, %arg1 : i32
    %c0_i32 = arith.constant 0 : i32
    %c0_i32_0 = arith.constant 0 : i32
    return %c0_i32, %1 : i32, i32
  }
  func.func @transform_3(%arg0: i32, %arg1: i32, %arg2: memref<2xi32, #tpu.memory_space<smem>>) -> (i32, i32) {
    %c0_i32 = arith.constant 0 : i32
    %c0_i32_0 = arith.constant 0 : i32
    %c0_i32_1 = arith.constant 0 : i32
    return %c0_i32, %c0_i32_0 : i32, i32
  }
  func.func @transform_4(%arg0: i32, %arg1: i32, %arg2: memref<2xi32, #tpu.memory_space<smem>>) -> (i32, i32) {
    %c0_i32 = arith.constant 0 : i32
    %c0_i32_0 = arith.constant 0 : i32
    %c0_i32_1 = arith.constant 0 : i32
    return %c0_i32, %c0_i32_0 : i32, i32
  }
  func.func @transform_5(%arg0: i32, %arg1: i32, %arg2: memref<2xi32, #tpu.memory_space<smem>>) -> (i32, i32) {
    %c0_i32 = arith.constant 0 : i32
    %c0_i32_0 = arith.constant 0 : i32
    %c0_i32_1 = arith.constant 0 : i32
    return %c0_i32, %c0_i32_0 : i32, i32
  }
  func.func @transform_6(%arg0: i32, %arg1: i32, %arg2: memref<2xi32, #tpu.memory_space<smem>>) -> (i32, i32) {
    %c0_i32 = arith.constant 0 : i32
    %c0_i32_0 = arith.constant 0 : i32
    %c0_i32_1 = arith.constant 0 : i32
    return %c0_i32, %c0_i32_0 : i32, i32
  }
  func.func @transform_7(%arg0: i32, %arg1: i32, %arg2: memref<2xi32, #tpu.memory_space<smem>>) -> (i32, i32) {
    %c0_i32 = arith.constant 0 : i32
    %c0_i32_0 = arith.constant 0 : i32
    return %arg0, %c0_i32 : i32, i32
  }
}

</mosaic_0001>

<llo_original>
// kernel: tpu_custom_call.1
$region0: #{tpu_custom_call.1}
  #allocation0 [shape = 'u32[]', space=smem, size = 0x4, offset = 0x4, fixed_abs, tag = 'smem constant byte address 0x4 - core index']
  #allocation1 [shape = 'u32[72,128]{1,0:T(1,128)}', space=vmem, size = 0x9000, scoped, tag = 'internal scratch']
  #allocation2 [shape = 's32[8,128]{1,0:T(8,128)}', space=vmem, size = 0x1000, scoped, tag = 'scratch operand']
  #allocation3 [shape = 's32[8,128]{1,0:T(8,128)}', space=vmem, size = 0x1000, scoped, tag = 'scratch operand']
  #allocation4 [shape = 's32[1]{0}', space=sflag, size = 0x4, scoped, tag = 'scoped memory for tpu_custom_call.1']
  #allocation5 [shape = 'u8[512]{0}', space=smem, size = 0x200, scoped, tag = 'prefetched SMEM operand 0']
  %s0 = inlined_call_operand.vmem [shape: s32[2], index: 0, kind: input, shape index: {}]
  %s1 = inlined_call_operand.vmem [shape: s32[1,256], index: 1, kind: input, shape index: {}]
  %s2 = inlined_call_operand.vmem [shape: s32[1,256], index: 2, kind: input, shape index: {}]
  %s3 = inlined_call_operand.vmem [shape: f32[6,256], index: 3, kind: input, shape index: {}]
  %s4 = inlined_call_operand.vmem [shape: f32[4,8], index: 4, kind: input, shape index: {}]
  %s5 = inlined_call_operand.vmem [shape: f32[32,6], index: 5, kind: input, shape index: {}]
  %s6 = inlined_call_operand.vmem [shape: f32[32,1], index: 6, kind: input, shape index: {}]
  %s7 = inlined_call_operand.vmem [shape: f32[8,1], index: 7, kind: input, shape index: {}]
  %s8 = inlined_call_operand.vmem [shape: f32[16,8], index: 8, kind: output, shape index: {}]
  %s9 = sld [smem:[#allocation0]]
  $region69: #{tpu_custom_call.1} parent=0
    _
  %s11 = ssub.s32 1, %s9
  %s12 = scalar_select 0, %s11, %s9
  %s14 = sshll.u32 %s0, 4
  %s15 = int_to_ptr.vmem [resolvable:$true] %s14
  %17 = dma.vmem_to_smem %s15, 16, [#allocation5], [#allocation4]
  %19 = dma.done [#allocation4], 16
  %20 = sfence
  loop: start=0, step=1, limit=4
  $region2: #{tpu_custom_call.1} parent=0 // loop_pre_header
    _
  $region3: #{tpu_custom_call.1} parent=0 // loop_header
    %s22 = sphi 0, %s26
    %p23 = scmp.ge.s32.totalorder %s22, 4
    %s29 = sphi 0, %s41
    %s30 = sphi 0, %s37
    %s31 = sphi 0, %s29
    %s32 = sphi 0, %s30
    %s33 = sphi 0, %s31
    %s34 = sphi 0, %s32
    %s46 = sphi 0, %s48
    %s49 = sphi 0, %s46
    %s50 = sphi 0, %s49
    %s66 = sphi 0, %s50
    %s74 = sphi 0, %s76
    %s77 = sphi 0, %s74
    %s78 = sphi 0, %s77
    %s94 = sphi 0, %s78
    %s102 = sphi 0, %s104
    %s105 = sphi 0, %s102
    %s106 = sphi 0, %s105
    %s122 = sphi 0, %s106
    %s126 = sphi 0, %s126
    %s128 = sphi 0, %s126
    %s129 = sphi 0, %s128
    %s143 = sphi 0, %s129
    %s147 = sphi 0, %s147
    %s149 = sphi 0, %s147
    %s150 = sphi 0, %s149
    %s164 = sphi 0, %s150
    %s168 = sphi 0, %s168
    %s170 = sphi 0, %s168
    %s171 = sphi 0, %s170
    %s185 = sphi 0, %s171
    %s189 = sphi 0, %s189
    %s191 = sphi 0, %s189
    %s192 = sphi 0, %s191
    %s206 = sphi 0, %s192
    %s212 = sphi 0, %s214
    %s215 = sphi 0, %s212
    %s216 = sphi 0, %s215
    %s232 = sphi 0, %s216
  $region4: #{tpu_custom_call.1} parent=0 // loop_header_branch
    %25 = sbr.rel (%p23) target = $region8
  $region5: #{tpu_custom_call.1} parent=0 // loop_body
    %s27 = ssub.s32 %s22, 1
    %s28 = ssub.s32 %s22, 2
    %s35 = sadd.s32 1, %s30
    %p36 = scmp.ge.s32.totalorder %s35, 1
    %s37 = scalar_select %p36, 0, %s35
    %s38 = sadd.s32 1, %s29
    %s39 = scalar_select %p36, %s38, %s29
    %p40 = scmp.ge.s32.totalorder %s39, 2
    %s41 = scalar_select %p40, 0, %s39
    %s42 = sadd.s32 %s29, %s30
    %s43 = sadd.s32 %s41, %s37
    %s44 = ssub.s32 %s42, %s43
    %p45 = scmp.eq.s32.totalorder %s44, 0
    %s47 = sadd.s32 %s46, 1
    %s48 = scalar_select %p45, %s46, %s47
    %p51 = pneg %p45
    %p52 = scmp.eq.s32.totalorder %s22, 1
    %p53 = por %p51, %p52
    %p54 = scmp.ne.s32.totalorder %s46, %s49
    %p55 = scmp.eq.s32.totalorder %s22, 0
    %p56 = por %p54, %p55
    %p57 = scmp.ne.s32.totalorder %s46, %s49
    %p58 = scmp.eq.s32.totalorder %s27, 1
    %p59 = por %p57, %p58
    %p60 = scmp.ne.s32.totalorder %s49, %s50
    %p61 = scmp.eq.s32.totalorder %s27, 0
    %p62 = por %p60, %p61
    %p63 = scmp.ne.s32.totalorder %s49, %s50
    %p64 = scmp.eq.s32.totalorder %s28, 1
    %p65 = por %p63, %p64
    %p67 = scmp.ne.s32.totalorder %s50, %s66
    %p68 = scmp.eq.s32.totalorder %s28, 0
    %p69 = por %p67, %p68
    %s70 = sadd.s32 %s29, %s30
    %s71 = sadd.s32 %s41, %s37
    %s72 = ssub.s32 %s70, %s71
    %p73 = scmp.eq.s32.totalorder %s72, 0
    %s75 = sadd.s32 %s74, 1
    %s76 = scalar_select %p73, %s74, %s75
    %p79 = pneg %p73
    %p80 = scmp.eq.s32.totalorder %s22, 1
    %p81 = por %p79, %p80
    %p82 = scmp.ne.s32.totalorder %s74, %s77
    %p83 = scmp.eq.s32.totalorder %s22, 0
    %p84 = por %p82, %p83
    %p85 = scmp.ne.s32.totalorder %s74, %s77
    %p86 = scmp.eq.s32.totalorder %s27, 1
    %p87 = por %p85, %p86
    %p88 = scmp.ne.s32.totalorder %s77, %s78
    %p89 = scmp.eq.s32.totalorder %s27, 0
    %p90 = por %p88, %p89
    %p91 = scmp.ne.s32.totalorder %s77, %s78
    %p92 = scmp.eq.s32.totalorder %s28, 1
    %p93 = por %p91, %p92
    %p95 = scmp.ne.s32.totalorder %s78, %s94
    %p96 = scmp.eq.s32.totalorder %s28, 0
    %p97 = por %p95, %p96
    %s98 = sadd.s32 %s29, %s30
    %s99 = sadd.s32 %s41, %s37
    %s100 = ssub.s32 %s98, %s99
    %p101 = scmp.eq.s32.totalorder %s100, 0
    %s103 = sadd.s32 %s102, 1
    %s104 = scalar_select %p101, %s102, %s103
    %p107 = pneg %p101
    %p108 = scmp.eq.s32.totalorder %s22, 1
    %p109 = por %p107, %p108
    %p110 = scmp.ne.s32.totalorder %s102, %s105
    %p111 = scmp.eq.s32.totalorder %s22, 0
    %p112 = por %p110, %p111
    %p113 = scmp.ne.s32.totalorder %s102, %s105
    %p114 = scmp.eq.s32.totalorder %s27, 1
    %p115 = por %p113, %p114
    %p116 = scmp.ne.s32.totalorder %s105, %s106
    %p117 = scmp.eq.s32.totalorder %s27, 0
    %p118 = por %p116, %p117
    %p119 = scmp.ne.s32.totalorder %s105, %s106
    %p120 = scmp.eq.s32.totalorder %s28, 1
    %p121 = por %p119, %p120
    %p123 = scmp.ne.s32.totalorder %s106, %s122
    %p124 = scmp.eq.s32.totalorder %s28, 0
    %p125 = por %p123, %p124
    %s127 = sadd.s32 %s126, 1
    %p130 = scmp.eq.s32.totalorder %s22, 1
    %p131 = scmp.ne.s32.totalorder %s126, %s128
    %p132 = scmp.eq.s32.totalorder %s22, 0
    %p133 = por %p131, %p132
    %p134 = scmp.ne.s32.totalorder %s126, %s128
    %p135 = scmp.eq.s32.totalorder %s27, 1
    %p136 = por %p134, %p135
    %p137 = scmp.ne.s32.totalorder %s128, %s129
    %p138 = scmp.eq.s32.totalorder %s27, 0
    %p139 = por %p137, %p138
    %p140 = scmp.ne.s32.totalorder %s128, %s129
    %p141 = scmp.eq.s32.totalorder %s28, 1
    %p142 = por %p140, %p141
    %p144 = scmp.ne.s32.totalorder %s129, %s143
    %p145 = scmp.eq.s32.totalorder %s28, 0
    %p146 = por %p144, %p145
    %s148 = sadd.s32 %s147, 1
    %p151 = scmp.eq.s32.totalorder %s22, 1
    %p152 = scmp.ne.s32.totalorder %s147, %s149
    %p153 = scmp.eq.s32.totalorder %s22, 0
    %p154 = por %p152, %p153
    %p155 = scmp.ne.s32.totalorder %s147, %s149
    %p156 = scmp.eq.s32.totalorder %s27, 1
    %p157 = por %p155, %p156
    %p158 = scmp.ne.s32.totalorder %s149, %s150
    %p159 = scmp.eq.s32.totalorder %s27, 0
    %p160 = por %p158, %p159
    %p161 = scmp.ne.s32.totalorder %s149, %s150
    %p162 = scmp.eq.s32.totalorder %s28, 1
    %p163 = por %p161, %p162
    %p165 = scmp.ne.s32.totalorder %s150, %s164
    %p166 = scmp.eq.s32.totalorder %s28, 0
    %p167 = por %p165, %p166
    %s169 = sadd.s32 %s168, 1
    %p172 = scmp.eq.s32.totalorder %s22, 1
    %p173 = scmp.ne.s32.totalorder %s168, %s170
    %p174 = scmp.eq.s32.totalorder %s22, 0
    %p175 = por %p173, %p174
    %p176 = scmp.ne.s32.totalorder %s168, %s170
    %p177 = scmp.eq.s32.totalorder %s27, 1
    %p178 = por %p176, %p177
    %p179 = scmp.ne.s32.totalorder %s170, %s171
    %p180 = scmp.eq.s32.totalorder %s27, 0
    %p181 = por %p179, %p180
    %p182 = scmp.ne.s32.totalorder %s170, %s171
    %p183 = scmp.eq.s32.totalorder %s28, 1
    %p184 = por %p182, %p183
    %p186 = scmp.ne.s32.totalorder %s171, %s185
    %p187 = scmp.eq.s32.totalorder %s28, 0
    %p188 = por %p186, %p187
    %s190 = sadd.s32 %s189, 1
    %p193 = scmp.eq.s32.totalorder %s22, 1
    %p194 = scmp.ne.s32.totalorder %s189, %s191
    %p195 = scmp.eq.s32.totalorder %s22, 0
    %p196 = por %p194, %p195
    %p197 = scmp.ne.s32.totalorder %s189, %s191
    %p198 = scmp.eq.s32.totalorder %s27, 1
    %p199 = por %p197, %p198
    %p200 = scmp.ne.s32.totalorder %s191, %s192
    %p201 = scmp.eq.s32.totalorder %s27, 0
    %p202 = por %p200, %p201
    %p203 = scmp.ne.s32.totalorder %s191, %s192
    %p204 = scmp.eq.s32.totalorder %s28, 1
    %p205 = por %p203, %p204
    %p207 = scmp.ne.s32.totalorder %s192, %s206
    %p208 = scmp.eq.s32.totalorder %s28, 0
    %p209 = por %p207, %p208
    %s210 = ssub.s32 %s29, %s41
    %p211 = scmp.eq.s32.totalorder %s210, 0
    %s213 = sadd.s32 %s212, 1
    %s214 = scalar_select %p211, %s212, %s213
    %p217 = pneg %p211
    %p218 = scmp.eq.s32.totalorder %s22, 1
    %p219 = por %p217, %p218
    %p220 = scmp.ne.s32.totalorder %s212, %s215
    %p221 = scmp.eq.s32.totalorder %s22, 0
    %p222 = por %p220, %p221
    %p223 = scmp.ne.s32.totalorder %s212, %s215
    %p224 = scmp.eq.s32.totalorder %s27, 1
    %p225 = por %p223, %p224
    %p226 = scmp.ne.s32.totalorder %s215, %s216
    %p227 = scmp.eq.s32.totalorder %s27, 0
    %p228 = por %p226, %p227
    %p229 = scmp.ne.s32.totalorder %s215, %s216
    %p230 = scmp.eq.s32.totalorder %s28, 1
    %p231 = por %p229, %p230
    %p233 = scmp.ne.s32.totalorder %s216, %s232
    %p234 = scmp.eq.s32.totalorder %s28, 0
    %p235 = por %p233, %p234
    %p236 = scmp.le.s32.totalorder 1, %s22
    %p237 = scmp.lt.s32.totalorder %s22, 3
    %p238 = pnand %p236, %p237
    %p239 = pneg %p238
    // Predicated region
    $region9: #{tpu_custom_call.1} parent=5 // pred_check
      _
    $region10: #{tpu_custom_call.1} parent=5 // pred_check_branch
      %241 = sbr.rel (%p238) target = $region12
    $region11: #{tpu_custom_call.1} parent=5 // pred_region
      %s242 = ssub.s32 %s22, 1
      // Predicated region
      $region13: #{tpu_custom_call.1} parent=11 // pred_check
        %p243 = pneg %p139
      $region14: #{tpu_custom_call.1} parent=11 // pred_check_branch
        %245 = sbr.rel (%p243) target = $region16
      $region15: #{tpu_custom_call.1} parent=11 // pred_region
        _
      $region16: #{tpu_custom_call.1} parent=11 // pred_fallthru
        _
      // Predicated region
      $region17: #{tpu_custom_call.1} parent=11 // pred_check
        %p246 = pneg %p160
      $region18: #{tpu_custom_call.1} parent=11 // pred_check_branch
        %248 = sbr.rel (%p246) target = $region20
      $region19: #{tpu_custom_call.1} parent=11 // pred_region
        _
      $region20: #{tpu_custom_call.1} parent=11 // pred_fallthru
        _
      // Predicated region
      $region21: #{tpu_custom_call.1} parent=11 // pred_check
        %p249 = pneg %p181
      $region22: #{tpu_custom_call.1} parent=11 // pred_check_branch
        %251 = sbr.rel (%p249) target = $region24
      $region23: #{tpu_custom_call.1} parent=11 // pred_region
        _
      $region24: #{tpu_custom_call.1} parent=11 // pred_fallthru
        _
      // Predicated region
      $region25: #{tpu_custom_call.1} parent=11 // pred_check
        %p252 = pneg %p202
      $region26: #{tpu_custom_call.1} parent=11 // pred_check_branch
        %254 = sbr.rel (%p252) target = $region28
      $region27: #{tpu_custom_call.1} parent=11 // pred_region
        _
      $region28: #{tpu_custom_call.1} parent=11 // pred_fallthru
        _
    $region12: #{tpu_custom_call.1} parent=5 // pred_fallthru
      _
    %p255 = scmp.lt.s32.totalorder %s22, 2
    // Predicated region
    $region29: #{tpu_custom_call.1} parent=5 // pred_check
      %p256 = pneg %p255
    $region30: #{tpu_custom_call.1} parent=5 // pred_check_branch
      %258 = sbr.rel (%p256) target = $region32
    $region31: #{tpu_custom_call.1} parent=5 // pred_region
      // Predicated region
      $region33: #{tpu_custom_call.1} parent=31 // pred_check
        %p259 = pneg %p56
      $region34: #{tpu_custom_call.1} parent=31 // pred_check_branch
        %261 = sbr.rel (%p259) target = $region36
      $region35: #{tpu_custom_call.1} parent=31 // pred_region
        %s262 = sadd.s32 %s29, %s30
        %p263 = scmp.lt.s32.totalorder %s262, 1
        %s264 = scalar_select %p263, %s262, 1
        %s265 = scalar_lea.vmem %s1, %s264
        %s266 = sadd.s32 %s29, %s30
      $region36: #{tpu_custom_call.1} parent=31 // pred_fallthru
        _
      // Predicated region
      $region37: #{tpu_custom_call.1} parent=31 // pred_check
        %p267 = pneg %p84
      $region38: #{tpu_custom_call.1} parent=31 // pred_check_branch
        %269 = sbr.rel (%p267) target = $region40
      $region39: #{tpu_custom_call.1} parent=31 // pred_region
        %s270 = sadd.s32 %s29, %s30
        %p271 = scmp.lt.s32.totalorder %s270, 1
        %s272 = scalar_select %p271, %s270, 1
        %s273 = scalar_lea.vmem %s2, %s272
        %s274 = sadd.s32 %s29, %s30
      $region40: #{tpu_custom_call.1} parent=31 // pred_fallthru
        _
      // Predicated region
      $region41: #{tpu_custom_call.1} parent=31 // pred_check
        %p275 = pneg %p112
      $region42: #{tpu_custom_call.1} parent=31 // pred_check_branch
        %277 = sbr.rel (%p275) target = $region44
      $region43: #{tpu_custom_call.1} parent=31 // pred_region
        %s278 = sadd.s32 %s29, %s30
        %p279 = scmp.lt.s32.totalorder %s278, 1
        %s280 = scalar_select %p279, %s278, 1
        %s281 = smul.addr %s280, 8
        %s282 = scalar_lea.vmem %s3, %s281
        %s283 = sadd.s32 %s29, %s30
      $region44: #{tpu_custom_call.1} parent=31 // pred_fallthru
        _
    $region32: #{tpu_custom_call.1} parent=5 // pred_fallthru
      _
    %p284 = scmp.le.s32.totalorder 1, %s22
    %p285 = scmp.lt.s32.totalorder %s22, 3
    %p286 = pnand %p284, %p285
    %p287 = pneg %p286
    // Predicated region
    $region45: #{tpu_custom_call.1} parent=5 // pred_check
      _
    $region46: #{tpu_custom_call.1} parent=5 // pred_check_branch
      %289 = sbr.rel (%p286) target = $region48
    $region47: #{tpu_custom_call.1} parent=5 // pred_region
      %s290 = ssub.s32 %s22, 1
      %s291 = sadd.s32 %s31, %s32
      %p292 = scmp.lt.s32.totalorder %s291, 1
      %s293 = scalar_select %p292, %s291, 1
      %s294 = scalar_lea.vmem %s1, %s293
      %p295 = pneg %p62
      %p296 = pneg %p59
      %s297 = sadd.s32 %s31, %s32
      %p298 = scmp.lt.s32.totalorder %s297, 1
      %s299 = scalar_select %p298, %s297, 1
      %s300 = scalar_lea.vmem %s2, %s299
      %p301 = pneg %p90
      %p302 = pneg %p87
      %s303 = sadd.s32 %s31, %s32
      %p304 = scmp.lt.s32.totalorder %s303, 1
      %s305 = scalar_select %p304, %s303, 1
      %s306 = smul.addr %s305, 8
      %s307 = scalar_lea.vmem %s3, %s306
      %p308 = pneg %p118
      %p309 = pneg %p115
      %p310 = pneg %p139
      %p311 = pneg %p136
      %p312 = pneg %p160
      %p313 = pneg %p157
      %p314 = pneg %p181
      %p315 = pneg %p178
      %p316 = pneg %p202
      %p317 = pneg %p199
      %p318 = pneg %p228
      %p319 = pneg %p225
      %p320 = scmp.lt.s32.totalorder %s31, 1
      %s321 = scalar_select %p320, %s31, 1
      %s322 = smul.addr %s321, 8
      %s323 = scalar_lea.vmem %s8, %s322
      %s324 = sadd.s32 %s31, %s32
      %p325 = scmp.lt.s32.totalorder %s324, 1
      %s326 = scalar_select %p325, %s324, 1
      %s327 = scalar_lea.vmem %s1, %s326
      %s328 = sadd.s32 %s31, %s32
      %s329 = sadd.s32 %s31, %s32
      %p330 = scmp.lt.s32.totalorder %s329, 1
      %s331 = scalar_select %p330, %s329, 1
      %s332 = scalar_lea.vmem %s2, %s331
      %s333 = sadd.s32 %s31, %s32
      %s334 = sadd.s32 %s31, %s32
      %p335 = scmp.lt.s32.totalorder %s334, 1
      %s336 = scalar_select %p335, %s334, 1
      %s337 = smul.addr %s336, 8
      %s338 = scalar_lea.vmem %s3, %s337
      %s339 = sadd.s32 %s31, %s32
      %p340 = scmp.lt.s32.totalorder %s31, 1
      %s341 = scalar_select %p340, %s31, 1
      %s342 = smul.addr %s341, 8
      %s343 = scalar_lea.vmem %s8, %s342
      %p344 = scmp.eq.s32.totalorder %s32, 0
      // Predicated region
      $region49: #{tpu_custom_call.1} parent=47 // pred_check
        %p345 = pneg %p344
      $region50: #{tpu_custom_call.1} parent=47 // pred_check_branch
        %347 = sbr.rel (%p345) target = $region52
      $region51: #{tpu_custom_call.1} parent=47 // pred_region
        %vm348 = vcmask 64512
        %349 = vst.msk [vmem:[%s343] sm:$0xff] %vm348, 0.0
        %v350 = vlaneseq
        %v351 = vshrl.u32 %v350, 7
        %352 = vst [vmem:[#allocation2] sm:$0xff] %v351
        %353 = vst [vmem:[#allocation3] sm:$0xff] %v351
      $region52: #{tpu_custom_call.1} parent=47 // pred_fallthru
        _
      %v354 = vld [vmem:[%s5] sm:$0xff]
      %v355 = vld [vmem:[%s5 + $0x8] sm:$0xff]
      %v356 = vld [vmem:[%s5 + $0x10] sm:$0xff]
      %v357 = vld [vmem:[%s5 + $0x18] sm:$0xff]
      %v358 = vld [vmem:[%s338] sm:$0x3f]
      %v359 = vld [vmem:[%s6] sm:$0xff]
      %v360 = vld [vmem:[%s6 + $0x8] sm:$0xff]
      %v361 = vld [vmem:[%s6 + $0x10] sm:$0xff]
      %v362 = vld [vmem:[%s6 + $0x18] sm:$0xff]
      %364 = vset.pattern.permute.xlu0 0
      %365 = vperm.xlu0 %364, %v359
      %v366 = vpop.permute.xlu0 %365
      %369 = vset.pattern.permute.xlu0 0
      %370 = vperm.xlu0 %369, %v360
      %v371 = vpop.permute.xlu0 %370
      %374 = vset.pattern.permute.xlu0 0
      %375 = vperm.xlu0 %374, %v361
      %v376 = vpop.permute.xlu0 %375
      %379 = vset.pattern.permute.xlu0 0
      %380 = vperm.xlu0 %379, %v362
      %v381 = vpop.permute.xlu0 %380
      %vm383 = vcmask 48128
      %v385 = vsel %vm383, %v354, 0
      %v388 = vsel %vm383, %v355, 0
      %v391 = vsel %vm383, %v356, 0
      %v394 = vsel %vm383, %v357, 0
      %vm396 = vcmask 1045504
      %v398 = vsel %vm396, %v358, 0
      %400 = vmatpush.msra.mxu0 0.0
      %401 = vmatpush.msra.mxu0 0.0
      %402 = vmatpush.msra.mxu0 0.0
      %403 = vmatpush.msra.mxu0 0.0
      %404 = vmatpush.msra.mxu0 0.0
      %405 = vmatpush.msra.mxu0 0.0
      %406 = vmatpush.msra.mxu0 0.0
      %407 = vmatpush.msra.mxu0 0.0
      %408 = vmatpush.msra.mxu0 0.0
      %409 = vmatpush.msra.mxu0 0.0
      %410 = vmatpush.msra.mxu0 0.0
      %411 = vmatpush.msra.mxu0 0.0
      %412 = vmatpush.msra.mxu0 0.0
      %413 = vmatpush.msra.mxu0 0.0
      %414 = vmatpush.msra.mxu0 0.0
      %415 = vmatpush.msra.mxu0 %v398
      %416 = vmatmul.f32.gmra.mxu0 %v385
      %v417 = vpop.f32.mrf.mxu0
      %v418 = vadd.f32 %v366, %v417
      %419 = vmatmul.f32.gmra.mxu0 %v388
      %v420 = vpop.f32.mrf.mxu0
      %v421 = vadd.f32 %v371, %v420
      %422 = vmatmul.f32.gmra.mxu0 %v391
      %v423 = vpop.f32.mrf.mxu0
      %v424 = vadd.f32 %v376, %v423
      %425 = vmatmul.f32.gmra.mxu0 %v394
      %v426 = vpop.f32.mrf.mxu0
      %v427 = vadd.f32 %v381, %v426
      %428 = vdwg.mxu0
      %v429 = vld [vmem:[#allocation2] sm:$0xff]
      %v430 = vld [vmem:[%s332] sm:$0x1]
      %v431 = vperm.slane %v430, 0
      %vm432 = vcmp.eq.s32.totalorder %v429, %v431
      %v433 = vsel %vm432, 1, 0
      %v434 = vcvt.s32.f32 %v433
      %v435 = vld [vmem:[%s4] sm:$0xf]
      %vm436 = vcmask 64512
      %v438 = vsel %vm436, %v435, 0
      %440 = vmatpush.msra.mxu0 0.0
      %441 = vmatpush.msra.mxu0 0.0
      %442 = vmatpush.msra.mxu0 0.0
      %443 = vmatpush.msra.mxu0 0.0
      %444 = vmatpush.msra.mxu0 0.0
      %445 = vmatpush.msra.mxu0 0.0
      %446 = vmatpush.msra.mxu0 0.0
      %447 = vmatpush.msra.mxu0 0.0
      %448 = vmatpush.msra.mxu0 0.0
      %449 = vmatpush.msra.mxu0 0.0
      %450 = vmatpush.msra.mxu0 0.0
      %451 = vmatpush.msra.mxu0 0.0
      %452 = vmatpush.msra.mxu0 0.0
      %453 = vmatpush.msra.mxu0 0.0
      %454 = vmatpush.msra.mxu0 0.0
      %455 = vmatpush.msra.mxu0 %v434
      %456 = vmatmul.f32.gmra.mxu0 %v438
      %v457 = vpop.f32.mrf.mxu0
      %v458 = vadd.f32 0.0, %v457
      %459 = vdwg.mxu0
      %v460 = vperm.slane %v458, 0
      %v461 = vmul.f32 %v460, %v418
      %v462 = vperm.slane %v458, 1
      %v463 = vmul.f32 %v462, %v421
      %v464 = vadd.f32 %v461, %v463
      %v465 = vperm.slane %v458, 2
      %v466 = vmul.f32 %v465, %v424
      %v467 = vadd.f32 %v464, %v466
      %v468 = vperm.slane %v458, 3
      %v469 = vmul.f32 %v468, %v427
      %v470 = vadd.f32 %v467, %v469
      %s471 = sadd.s32 %s31, %s32
      %s472 = sld [smem:[#allocation5 + %s471]]
      %v473 = vld [vmem:[%s327] sm:$0x1]
      %v474 = vstv %s472
      %v475 = vsub.s32 %v473, %v474
      %v476 = vld [vmem:[#allocation3] sm:$0xff]
      %v477 = vperm.slane %v475, 0
      %vm478 = vcmp.eq.s32.totalorder %v476, %v477
      %v479 = vsel %vm478, 1, 0
      %v480 = vcvt.s32.f32 %v479
      %481 = vmatpush.xpose.msra.mxu0 0.0
      %482 = vmatpush.xpose.msra.mxu0 0.0
      %483 = vmatpush.xpose.msra.mxu0 0.0
      %484 = vmatpush.xpose.msra.mxu0 0.0
      %485 = vmatpush.xpose.msra.mxu0 0.0
      %486 = vmatpush.xpose.msra.mxu0 0.0
      %487 = vmatpush.xpose.msra.mxu0 0.0
      %488 = vmatpush.xpose.msra.mxu0 0.0
      %489 = vmatpush.xpose.msra.mxu0 0.0
      %490 = vmatpush.xpose.msra.mxu0 0.0
      %491 = vmatpush.xpose.msra.mxu0 0.0
      %492 = vmatpush.xpose.msra.mxu0 0.0
      %493 = vmatpush.xpose.msra.mxu0 0.0
      %494 = vmatpush.xpose.msra.mxu0 0.0
      %495 = vmatpush.xpose.msra.mxu0 0.0
      %496 = vmatpush.xpose.msra.mxu0 %v470
      %497 = vmatmul.f32.gmra.mxu0 %v480
      %v498 = vpop.f32.mrf.mxu0
      %v499 = vadd.f32 0.0, %v498
      %500 = vdwg.mxu0
      %s501 = scalar_lea.vmem %s343, %s472
      %v502 = vld [vmem:[%s501] sm:$0xff]
      %v503 = vadd.f32 %v502, %v499
      %504 = vst.msk [vmem:[%s501] sm:$0xff] %vm436, %v503
      // Predicated region
      $region53: #{tpu_custom_call.1} parent=47 // pred_check
        %p505 = pneg %p344
      $region54: #{tpu_custom_call.1} parent=47 // pred_check_branch
        %507 = sbr.rel (%p505) target = $region56
      $region55: #{tpu_custom_call.1} parent=47 // pred_region
        %v508 = vld [vmem:[%s343] sm:$0xff]
        %v509 = vld [vmem:[%s7] sm:$0xff]
        %511 = vset.pattern.permute.xlu0 0
        %512 = vperm.xlu0 %511, %v509
        %v513 = vpop.permute.xlu0 %512
        %v515 = vmul.f32 %v508, %v513
        %516 = vst.msk [vmem:[%s343] sm:$0xff] %vm436, %v515
      $region56: #{tpu_custom_call.1} parent=47 // pred_fallthru
        _
      %p517 = scmp.lt.s32.totalorder %s31, 1
      %s518 = scalar_select %p517, %s31, 1
      %s519 = smul.addr %s518, 8
      %s520 = scalar_lea.vmem %s8, %s519
      // Predicated region
      $region57: #{tpu_custom_call.1} parent=47 // pred_check
        %p521 = pneg %p225
      $region58: #{tpu_custom_call.1} parent=47 // pred_check_branch
        %523 = sbr.rel (%p521) target = $region60
      $region59: #{tpu_custom_call.1} parent=47 // pred_region
        _
      $region60: #{tpu_custom_call.1} parent=47 // pred_fallthru
        _
    $region48: #{tpu_custom_call.1} parent=5 // pred_fallthru
      _
    %p524 = scmp.le.s32.totalorder 2, %s22
    // Predicated region
    $region61: #{tpu_custom_call.1} parent=5 // pred_check
      %p525 = pneg %p524
    $region62: #{tpu_custom_call.1} parent=5 // pred_check_branch
      %527 = sbr.rel (%p525) target = $region64
    $region63: #{tpu_custom_call.1} parent=5 // pred_region
      %s528 = ssub.s32 %s22, 2
      // Predicated region
      $region65: #{tpu_custom_call.1} parent=63 // pred_check
        %p529 = pneg %p231
      $region66: #{tpu_custom_call.1} parent=63 // pred_check_branch
        %531 = sbr.rel (%p529) target = $region68
      $region67: #{tpu_custom_call.1} parent=63 // pred_region
        %p532 = scmp.lt.s32.totalorder %s33, 1
        %s533 = scalar_select %p532, %s33, 1
        %s534 = smul.addr %s533, 8
        %s535 = scalar_lea.vmem %s8, %s534
      $region68: #{tpu_custom_call.1} parent=63 // pred_fallthru
        _
    $region64: #{tpu_custom_call.1} parent=5 // pred_fallthru
      _
  $region6: #{tpu_custom_call.1} parent=0 // loop_footer
    %s26 = sadd.s32 1, %s22
  $region7: #{tpu_custom_call.1} parent=0 // loop_footer_branch
    %21 = sbr.rel target = $region3
  $region8: #{tpu_custom_call.1} parent=0 // loop_exit
    _

</llo_original>
